<compile_context>
chip_gen: v5e
topology: v5e:2x2
jax: 0.10.0
libtpu: 0.0.40
codegen_flags: <defaults>
</compile_context>

<pallas_src>
import jax
import jax.numpy as jnp
from jax.experimental import pallas as pl
from jax.experimental.pallas import tpu as pltpu

# Widest-first lane-width candidates for the aligned (lane-dense) path.
_WIDE_LANES = (4096, 2048, 1024, 512, 256, 128)
# Keep in+out double-buffered tiles under v5e's 16 MiB scoped-VMEM default.
_MAX_TILE_BYTES = int(3.5 * (1 << 20))


def _copy_kernel(x_ref, o_ref):
    # A "view" has no arithmetic: identity copy of the current tile.
    o_ref[...] = x_ref[...]


def _sublane_multiple(dtype) -> int:
    itemsize = jnp.dtype(dtype).itemsize
    if itemsize in (1, 2, 4):
        return 8 * (4 // itemsize)  # f32 -> 8, bf16 -> 16, int8 -> 32
    return 8


def _round_up(n: int, m: int) -> int:
    return ((n + m - 1) // m) * m


def _as_2d_slab(x, total: int):
    """Metadata-only 2-D view of x preserving row-major element order."""
    for w in _WIDE_LANES:
        if total % w == 0:
            return x.reshape(total // w, w)
    # Ragged flat length: collapse every dim but the minor one.  The (8,128)
    # block rule is waived for full-extent dims and boundary row-blocks are
    # masked by Pallas, so no padding / trailing slice is needed.
    # TODO(synk): a huge *1-D* ragged input becomes a (1, total) slab here;
    # tile its lane dim instead if that ever exceeds the VMEM budget.
    minor = x.shape[-1] if x.ndim >= 1 else 1
    return x.reshape(-1, minor)


def _tile_rows(rows: int, w: int, itemsize: int, tile_bytes: int, sub: int) -> int:
    budget_rows = max(tile_bytes // (w * itemsize), 1)
    tr = max((budget_rows // sub) * sub, sub)
    if tr >= rows:
        if rows > 2 * sub:
            # Big enough to matter: force >= 2 grid steps so the DMA pipeline
            # has overlap and (on v7x) both TensorCores get work.
            tr = _round_up(pl.cdiv(rows, 2), sub)
        else:
            tr = rows  # genuinely small: one full-extent block
    return tr


def pallas_view(x, shape: int, *, materialize: bool = False,
                tile_bytes: int = 2 << 20, donate: bool = False):
    """Equivalent of torch `x.view(shape)` with `shape` a single int (or -1)."""
    total = x.size
    target = total if shape == -1 else int(shape)
    assert total == target, f"view size mismatch: {total} vs {target}"
    # TODO(synk): multi-dim view targets are not supported (module only uses 1-D).

    if not materialize:
        # A view is metadata-only: no HBM traffic, no kernel launch.
        return jnp.reshape(x, (target,))

    itemsize = jnp.dtype(x.dtype).itemsize
    tile_bytes = max(min(tile_bytes, _MAX_TILE_BYTES), 128 * itemsize)

    slab = _as_2d_slab(x, total)          # metadata reshape, row-major order
    rows, w = slab.shape
    sub = _sublane_multiple(x.dtype)
    tr = _tile_rows(rows, w, itemsize, tile_bytes, sub)
    grid = (pl.cdiv(rows, tr),)

    out2d = pl.pallas_call(
        _copy_kernel,
        out_shape=jax.ShapeDtypeStruct((rows, w), x.dtype),
        grid=grid,
        in_specs=[pl.BlockSpec((tr, w), lambda i: (i, 0))],
        out_specs=pl.BlockSpec((tr, w), lambda i: (i, 0)),
        compiler_params=pltpu.CompilerParams(
            dimension_semantics=("parallel",)),
        cost_estimate=pl.CostEstimate(
            flops=0, transcendentals=0,
            bytes_accessed=2 * total * itemsize),
        # donate=True reuses the input slab's HBM buffer for the output,
        # halving peak HBM footprint when the caller no longer needs x.
        input_output_aliases=({0: 0} if donate else {}),
    )(slab)

    return out2d.reshape((target,))       # metadata reshape


class View:
    """Pallas/JAX equivalent of the PyTorch View(shape) module."""

    def __init__(self, shape):
        self.shape = (shape,)

    def __call__(self, x, *, materialize: bool = False):
        return pallas_view(x, self.shape[0], materialize=materialize)


if __name__ == "__main__":
    key = jax.random.PRNGKey(0)
    k0, k1, k2 = jax.random.split(key, 3)

    # NCHW input as CNNDiscriminator would feed into View(shape).
    B, C, H, W = 2, 4, 16, 16
    x = jax.random.normal(k0, (B, C, H, W), dtype=jnp.float32)
    n = B * C * H * W
    view = View(n)

    # Default (metadata-only) path -- no kernel launch.
    y_fast = jax.block_until_ready(view(x))
    assert y_fast.shape == (n,) and y_fast.dtype == x.dtype
    assert bool(jnp.array_equal(y_fast, x.reshape(n)))

    # Explicit Pallas copy path (lane-dense aligned slab, single small block).
    y = jax.block_until_ready(view(x, materialize=True))
    assert y.shape == (n,) and y.dtype == x.dtype
    assert bool(jnp.array_equal(y, x.reshape(n)))

    # Medium aligned input -> wide lanes, >= 2 grid steps (pipelined copy).
    x1 = jax.random.normal(k1, (4, 8, 64, 64), dtype=jnp.float32)
    n1 = x1.size
    y1 = jax.block_until_ready(pallas_view(x1, n1, materialize=True))
    assert bool(jnp.array_equal(y1, x1.reshape(n1)))

    # Ragged (non-multiple-of-128) flat length: masked boundary block,
    # no pad / trailing slice, still exactly 1 HBM read + 1 HBM write.
    x2 = jax.random.normal(k2, (3, 5, 7, 9), dtype=jnp.float32)
    n2 = x2.size
    y2 = jax.block_until_ready(pallas_view(x2, n2, materialize=True))
    assert y2.shape == (n2,) and y2.dtype == x2.dtype
    assert bool(jnp.array_equal(y2, x2.reshape(n2)))

    print("KERNEL_OK")
</pallas_src>

<mosaic_0001>
module attributes {stable_mosaic.version = 11 : i64} {
  func.func @_copy_kernel(%arg0: i32, %arg1: memref<1x2048xf32, #tpu.memory_space<vmem>>, %arg2: memref<1x2048xf32, #tpu.memory_space<vmem>>) attributes {dimension_semantics = [#tpu.dimension_semantics<parallel>], iteration_bounds = array<i64: 1>, scalar_prefetch = 0 : i64, scratch_operands = 0 : i64, tpu.core_type = #tpu.core_type<tc>, window_params = [{transform_indices = @transform_0, window_bounds = array<i64: 1, 2048>}, {transform_indices = @transform_1, window_bounds = array<i64: 1, 2048>}]} {
    %c0 = arith.constant 0 : index
    %c0_0 = arith.constant 0 : index
    %0 = vector.load %arg1[%c0, %c0_0] : memref<1x2048xf32, #tpu.memory_space<vmem>>, vector<1x2048xf32>
    %c0_1 = arith.constant 0 : index
    %c0_2 = arith.constant 0 : index
    %1 = vector.load %arg2[%c0_1, %c0_2] : memref<1x2048xf32, #tpu.memory_space<vmem>>, vector<1x2048xf32>
    tpu.vector_store %arg2[%c0_1, %c0_2], %0 {strides = array<i32>} : memref<1x2048xf32, #tpu.memory_space<vmem>>, vector<1x2048xf32>,
    return
  }
  func.func @transform_0(%arg0: i32) -> (i32, i32) {
    %c0_i32 = arith.constant 0 : i32
    %c0_i32_0 = arith.constant 0 : i32
    return %arg0, %c0_i32 : i32, i32
  }
  func.func @transform_1(%arg0: i32) -> (i32, i32) {
    %c0_i32 = arith.constant 0 : i32
    %c0_i32_0 = arith.constant 0 : i32
    return %arg0, %c0_i32 : i32, i32
  }
}

</mosaic_0001>

<llo_original>
// kernel: tpu_custom_call.1
$region0: #{tpu_custom_call.1}
  #allocation0 [shape = 'u32[]', space=smem, size = 0x4, offset = 0x4, fixed_abs, tag = 'smem constant byte address 0x4 - core index']
  #allocation1 [shape = 'u32[72,128]{1,0:T(1,128)}', space=vmem, size = 0x9000, scoped, tag = 'internal scratch']
  %s0 = inlined_call_operand.hbm [shape: f32[1,2048], index: 0, kind: input, shape index: {}]
  %s1 = inlined_call_operand.hbm [shape: f32[1,2048], index: 1, kind: output, shape index: {}]
  %s2 = sld [smem:[#allocation0]]
  $region18: #{tpu_custom_call.1} parent=0
    _
  %s4 = ssub.s32 1, %s2
  %s5 = scalar_select 0, %s4, %s2
  $region1: #{tpu_custom_call.1} parent=0
    #allocation2 [shape = 'u8[8192]{0}', space=vmem, size = 0x2000, scoped, tag = 'input window, operand 0, single buffered']
    #allocation3 [shape = 's32[1]{0}', space=sflag, size = 0x4, scoped, tag = 'scoped memory for tpu_custom_call.1']
    #allocation4 [shape = 's32[1]{0}', space=sflag, size = 0x4, scoped, tag = 'scoped memory for tpu_custom_call.1']
    #allocation5 [shape = 'u8[8192]{0}', space=vmem, size = 0x2000, scoped, tag = 'output window, operand 0, single buffered']
    %6 = vsyncpa [#allocation3], 0
    %7 = vsyncpa [#allocation4], 0
    // Predicated region
    $region2: #{tpu_custom_call.1} parent=1 // pred_check
      _
    $region3: #{tpu_custom_call.1} parent=1 // pred_check_branch
      %9 = sbr.rel (0) target = $region5
    $region4: #{tpu_custom_call.1} parent=1 // pred_region
      %11 = vsyncadd [#allocation3], 0
      %s13 = sshll.u32 %s0, 4
      %s14 = int_to_ptr.hbm [resolvable:$true] %s13
      %s15 = sshll.u32 [#allocation2], 4
      %s16 = int_to_ptr.vmem [resolvable:$true] %s15
      %18 = dma.hbm_to_vmem [thread:$0]  %s14, 256, %s16, [#allocation3]
    $region5: #{tpu_custom_call.1} parent=1 // pred_fallthru
      _
    // Predicated region
    $region6: #{tpu_custom_call.1} parent=1 // pred_check
      _
    $region7: #{tpu_custom_call.1} parent=1 // pred_check_branch
      %20 = sbr.rel (0) target = $region9
    $region8: #{tpu_custom_call.1} parent=1 // pred_region
      %22 = dma.done [#allocation3], 256
    $region9: #{tpu_custom_call.1} parent=1 // pred_fallthru
      _
    %v23 = vld [vmem:[#allocation2] sm:$0xff]
    %v24 = vld [vmem:[#allocation2 + $0x8] sm:$0xff]
    %25 = vst [vmem:[#allocation5] sm:$0xff] %v23
    %26 = vst [vmem:[#allocation5 + $0x8] sm:$0xff] %v24
    // Predicated region
    $region10: #{tpu_custom_call.1} parent=1 // pred_check
      _
    $region11: #{tpu_custom_call.1} parent=1 // pred_check_branch
      %28 = sbr.rel (0) target = $region13
    $region12: #{tpu_custom_call.1} parent=1 // pred_region
      %30 = vsyncadd [#allocation4], 0
      %s32 = sshll.u32 [#allocation5], 4
      %s33 = int_to_ptr.vmem [resolvable:$true] %s32
      %s34 = sshll.u32 %s1, 4
      %s35 = int_to_ptr.hbm [resolvable:$true] %s34
      %37 = dma.vmem_to_hbm [thread:$0]  %s33, 256, %s35, [#allocation4]
    $region13: #{tpu_custom_call.1} parent=1 // pred_fallthru
      _
    // Predicated region
    $region14: #{tpu_custom_call.1} parent=1 // pred_check
      _
    $region15: #{tpu_custom_call.1} parent=1 // pred_check_branch
      %39 = sbr.rel (0) target = $region17
    $region16: #{tpu_custom_call.1} parent=1 // pred_region
      %41 = dma.done [#allocation4], 256
    $region17: #{tpu_custom_call.1} parent=1 // pred_fallthru
      _
    %42 = vsyncpa [#allocation3], 1
    %43 = vsyncpa [#allocation4], 1

</llo_original>
